<compile_context>
chip_gen: v5e
topology: v5e:2x2
jax: 0.10.0
libtpu: 0.0.40
codegen_flags: <defaults>
</compile_context>

<pallas_src>
import functools
import math

import jax
import jax.numpy as jnp
from jax import lax
from jax.experimental import pallas as pl
from jax.experimental.pallas import tpu as pltpu


# packed-weight rows (leading index of w_all); packed-bias rows of b_all
W_EDGE, W_GI_IN, W_GI_OUT, W_HH = 0, 1, 2, 3
B_EDGE, B_GI, B_HH = 0, 1, 2


def _gnn_fused_kernel(a_in_ref, a_out_ref, h_ref, w_ref, b_ref, out_ref,
                      *, m, hsz, step, compute_dtype):
    """Fused `step`-iteration SR-GNN GNNCell on one chunk of M = TB*S rows."""
    H = hsz

    # ---- loop-invariant loads / casts (hoisted; done once per grid step) ----
    hid = h_ref[...].astype(jnp.float32)                 # [M, H]
    a_in = a_in_ref[0].astype(compute_dtype)             # [M, M] block-diag
    a_out = a_out_ref[0].astype(compute_dtype)           # [M, M] block-diag

    w = w_ref[...].astype(compute_dtype)                 # [4, H, 3H]
    w_edge = w[W_EDGE][:, :2 * H]                        # [H, 2H]
    w_gi_in = w[W_GI_IN]                                 # [H, 3H]
    w_gi_out = w[W_GI_OUT]                               # [H, 3H]
    w_hh = w[W_HH]                                       # [H, 3H]

    b = b_ref[...].astype(jnp.float32)                   # [3, 3H]
    b_edge = b[B_EDGE:B_EDGE + 1, :2 * H]                # [1, 2H]
    b_gi = b[B_GI:B_GI + 1, :]                           # [1, 3H] (b_iah/b_oah folded)
    b_hh = b[B_HH:B_HH + 1, :]                           # [1, 3H]

    def cell(hcur):
        hc = hcur.astype(compute_dtype)                  # cast once per iter

        # fused linear_edge_in / linear_edge_out: one [M,H]x[H,2H] matmul
        h_io = (jnp.dot(hc, w_edge, preferred_element_type=jnp.float32)
                + b_edge).astype(compute_dtype)          # [M, 2H] = h_in || h_out

        # block-diagonal adjacency aggregation: two [M,M]x[M,H] MXU ops
        agg_in = jnp.dot(a_in, h_io[:, :H],
                         preferred_element_type=jnp.float32)    # [M, H]
        agg_out = jnp.dot(a_out, h_io[:, H:],
                          preferred_element_type=jnp.float32)   # [M, H]

        # packed gate matmuls (N = 3H); b_iah/b_oah already folded into b_gi
        gi = (jnp.dot(agg_in.astype(compute_dtype), w_gi_in,
                      preferred_element_type=jnp.float32)
              + jnp.dot(agg_out.astype(compute_dtype), w_gi_out,
                        preferred_element_type=jnp.float32)
              + b_gi)                                    # [M, 3H]
        gh = (jnp.dot(hc, w_hh, preferred_element_type=jnp.float32)
              + b_hh)                                    # [M, 3H]

        # densified transcendentals: one sigmoid over the (r||i) [M,2H] tile
        ri = jax.nn.sigmoid(gi[:, :2 * H] + gh[:, :2 * H])
        resetgate = ri[:, :H]
        inputgate = ri[:, H:]
        newgate = jnp.tanh(gi[:, 2 * H:] + resetgate * gh[:, 2 * H:])
        return newgate + inputgate * (hcur - newgate)

    if step <= 3:
        for _ in range(step):                            # small static unroll
            hid = cell(hid)
    else:
        hid = lax.fori_loop(0, step, lambda _, h: cell(h), hid)  # bound live set

    out_ref[...] = hid.astype(out_ref.dtype)


def pack_params(p, hsz):
    """Pre-split / transpose / fold torch-layout weights into [4,H,3H]+[3,3H]."""
    H = hsz
    wih_t = p["w_ih"].T                                  # [2H, 3H]
    w_gi_in, w_gi_out = wih_t[:H], wih_t[H:]             # [H, 3H] each
    w_edge = jnp.concatenate([p["w_edge_in"].T, p["w_edge_out"].T], axis=1)  # [H,2H]
    w_all = jnp.stack([
        jnp.pad(w_edge, ((0, 0), (0, H))),               # pad 2H -> 3H columns
        w_gi_in, w_gi_out, p["w_hh"].T,
    ], axis=0)                                           # [4, H, 3H]

    # fold the post-aggregation biases into the gi bias:
    #   (agg_in + b_iah)@W_in + (agg_out + b_oah)@W_out + b_ih
    #   = agg_in@W_in + agg_out@W_out + (b_ih + b_iah@W_in + b_oah@W_out)
    b_gi = p["b_ih"] + p["b_iah"] @ w_gi_in + p["b_oah"] @ w_gi_out   # [3H]
    b_edge = jnp.concatenate([p["b_edge_in"], p["b_edge_out"]])        # [2H]
    b_all = jnp.stack([
        jnp.pad(b_edge, (0, H)), b_gi, p["b_hh"],
    ], axis=0)                                           # [3, 3H]
    return w_all, b_all


def _block_diag(a):
    """[n_chunks, tb, S, S] -> per-chunk block-diagonal [n_chunks, tb*S, tb*S]."""
    n, tb, s, _ = a.shape
    eye = jnp.eye(tb, dtype=a.dtype)
    bd = jnp.einsum("bc,nbij->nbicj", eye, a)            # zero off-diagonal blocks
    return bd.reshape(n, tb * s, tb * s)


def _choose_tb(batch, seq):
    """M = tb*S <= 256 (MXU rows, v6e/v7x); prefer >= 2 chunks (v7x dual-TC)."""
    tb = max(1, min(batch, max(1, 256 // seq)))
    if batch > 1 and -(-batch // tb) < 2:
        tb = max(1, -(-batch // 2))
    return tb


def session_graph_forward(inputs, A, params, *, step=1, tb=None,
                          compute_dtype=jnp.float32, interpret=False):
    """SessionGraph.forward: embedding gather (glue) + fused multi-step GNN."""
    H = params["embedding"].shape[1]
    B, S = inputs.shape

    hidden = params["embedding"][inputs]                 # [B, S, H] (plain-JAX gather)
    w_all, b_all = pack_params(params, H)

    if tb is None:
        tb = _choose_tb(B, S)
    tb = max(1, min(tb, B))
    n_chunks = -(-B // tb)
    b_pad = n_chunks * tb
    m = tb * S                                           # rows per chunk

    a_in = A[:, :, :S]
    a_out = A[:, :, S:2 * S]
    if b_pad != B:
        pad = b_pad - B
        hidden = jnp.pad(hidden, ((0, pad), (0, 0), (0, 0)))
        a_in = jnp.pad(a_in, ((0, pad), (0, 0), (0, 0)))
        a_out = jnp.pad(a_out, ((0, pad), (0, 0), (0, 0)))

    hidden2d = hidden.reshape(b_pad * S, H)              # free wrapper-side reshape
    a_in_bd = _block_diag(a_in.reshape(n_chunks, tb, S, S))    # [n_chunks, M, M]
    a_out_bd = _block_diag(a_out.reshape(n_chunks, tb, S, S))  # [n_chunks, M, M]

    kernel = functools.partial(
        _gnn_fused_kernel, m=m, hsz=H, step=step, compute_dtype=compute_dtype)

    per_step_flops = (2 * m * H * 2 * H          # edge pack matmul
                      + 2 * 2 * m * m * H        # block-diag adjacency matmuls
                      + 2 * 2 * m * H * 3 * H    # gi matmuls
                      + 2 * m * H * 3 * H        # gh matmul
                      + 10 * m * H)              # elementwise gate blend
    cost = pl.CostEstimate(
        flops=n_chunks * step * per_step_flops,
        transcendentals=step * 3 * b_pad * S * H,
        bytes_accessed=4 * (2 * n_chunks * m * m          # A_in_bd + A_out_bd
                            + 2 * b_pad * S * H           # hidden in + out
                            + 4 * H * 3 * H + 3 * 3 * H), # packed weights + biases
    )

    out2d = pl.pallas_call(
        kernel,
        out_shape=jax.ShapeDtypeStruct((b_pad * S, H), hidden.dtype),
        grid_spec=pltpu.PrefetchScalarGridSpec(
            num_scalar_prefetch=0,
            grid=(n_chunks,),
            in_specs=[
                pl.BlockSpec((1, m, m), lambda i: (i, 0, 0)),     # A_in block-diag
                pl.BlockSpec((1, m, m), lambda i: (i, 0, 0)),     # A_out block-diag
                pl.BlockSpec((m, H), lambda i: (i, 0)),           # hidden chunk
                pl.BlockSpec((4, H, 3 * H), lambda i: (0, 0, 0)), # packed weights
                pl.BlockSpec((3, 3 * H), lambda i: (0, 0)),       # packed biases
            ],
            out_specs=pl.BlockSpec((m, H), lambda i: (i, 0)),
        ),
        compiler_params=pltpu.CompilerParams(
            dimension_semantics=("parallel",),   # chunks shard across TCs (v7x)
        ),
        cost_estimate=cost,
        interpret=interpret,
    )(a_in_bd, a_out_bd, hidden2d, w_all, b_all)

    return out2d.reshape(b_pad, S, H)[:B]


# ----------------------------- pure-JAX reference -----------------------------
def gnn_cell_ref(A, hidden, p):
    """Mirror of the PyTorch GNNCell math (torch-layout weights)."""
    S = A.shape[1]
    H = hidden.shape[-1]
    h_in = hidden @ p["w_edge_in"].T + p["b_edge_in"]
    h_out = hidden @ p["w_edge_out"].T + p["b_edge_out"]
    input_in = jnp.einsum("bij,bjh->bih", A[:, :, :S], h_in) + p["b_iah"]
    input_out = jnp.einsum("bij,bjh->bih", A[:, :, S:2 * S], h_out) + p["b_oah"]
    inputs_cat = jnp.concatenate([input_in, input_out], axis=2)
    gi = inputs_cat @ p["w_ih"].T + p["b_ih"]
    gh = hidden @ p["w_hh"].T + p["b_hh"]
    i_r, i_i, i_n = gi[..., :H], gi[..., H:2 * H], gi[..., 2 * H:]
    h_r, h_i, h_n = gh[..., :H], gh[..., H:2 * H], gh[..., 2 * H:]
    resetgate = jax.nn.sigmoid(i_r + h_r)
    inputgate = jax.nn.sigmoid(i_i + h_i)
    newgate = jnp.tanh(i_n + resetgate * h_n)
    return newgate + inputgate * (hidden - newgate)


def session_graph_forward_ref(inputs, A, p, step=1):
    hidden = p["embedding"][inputs]
    for _ in range(step):
        hidden = gnn_cell_ref(A, hidden, p)
    return hidden


def init_params(key, n_node, hidden_size):
    """reset_parameters(): every tensor uniform(-stdv, stdv), torch layouts."""
    stdv = 1.0 / math.sqrt(hidden_size)
    H = hidden_size
    keys = jax.random.split(key, 11)
    u = lambda k, shape: jax.random.uniform(
        k, shape, dtype=jnp.float32, minval=-stdv, maxval=stdv)
    return {
        "embedding": u(keys[0], (n_node, H)),
        "w_edge_in": u(keys[1], (H, H)),        # nn.Linear weight [out, in]
        "b_edge_in": u(keys[2], (H,)),
        "w_edge_out": u(keys[3], (H, H)),
        "b_edge_out": u(keys[4], (H,)),
        "b_iah": u(keys[5], (H,)),
        "b_oah": u(keys[6], (H,)),
        "w_ih": u(keys[7], (3 * H, 2 * H)),     # torch layout [3H, 2H]
        "b_ih": u(keys[8], (3 * H,)),
        "w_hh": u(keys[9], (3 * H, H)),         # torch layout [3H, H]
        "b_hh": u(keys[10], (3 * H,)),
    }


if __name__ == "__main__":
    B, S, H = 6, 8, 32          # batch, max session length, hiddenSize
    n_node = 50
    step = 2                    # exercises the fused multi-step (unrolled) path
    tb = 4                      # 2 batch chunks -> exercises grid + batch padding

    key = jax.random.PRNGKey(0)
    k_par, k_inp, k_adj = jax.random.split(key, 3)

    params = init_params(k_par, n_node, H)
    inputs = jax.random.randint(k_inp, (B, S), minval=0, maxval=n_node,
                                dtype=jnp.int32)
    A = jax.random.uniform(k_adj, (B, S, 2 * S), dtype=jnp.float32)

    out = session_graph_forward(inputs, A, params, step=step, tb=tb)
    out = jax.block_until_ready(out)

    ref = session_graph_forward_ref(inputs, A, params, step=step)
    assert out.shape == (B, S, H)
    assert jnp.allclose(out, ref, atol=1e-5, rtol=1e-5), "mismatch vs reference"

    # fori_loop path (step > 3) with auto-chosen tb (>=2 chunks heuristic)
    out5 = session_graph_forward(inputs, A, params, step=5)
    out5 = jax.block_until_ready(out5)
    ref5 = session_graph_forward_ref(inputs, A, params, step=5)
    assert jnp.allclose(out5, ref5, atol=1e-5, rtol=1e-5), "fori path mismatch"

    # bf16-matmul path (v6e/v7x): operands cast in-kernel, f32 accumulation and
    # f32 gate nonlinearities.  Loose tolerance due to bf16 rounding.
    out_bf16 = session_graph_forward(inputs, A, params, step=step, tb=tb,
                                     compute_dtype=jnp.bfloat16)
    out_bf16 = jax.block_until_ready(out_bf16)
    assert out_bf16.shape == (B, S, H)
    assert bool(jnp.all(jnp.isfinite(out_bf16)))
    assert jnp.allclose(out_bf16, ref, atol=0.15, rtol=0.15), "bf16 path mismatch"

    print("KERNEL_OK")
</pallas_src>

<mosaic_0001>
module attributes {stable_mosaic.version = 11 : i64} {
  func.func @_gnn_fused_kernel(%arg0: i32, %arg1: memref<1x32x32xf32, #tpu.memory_space<vmem>>, %arg2: memref<1x32x32xf32, #tpu.memory_space<vmem>>, %arg3: memref<32x32xf32, #tpu.memory_space<vmem>>, %arg4: memref<4x32x96xf32, #tpu.memory_space<vmem>>, %arg5: memref<3x96xf32, #tpu.memory_space<vmem>>, %arg6: memref<32x32xf32, #tpu.memory_space<vmem>>) attributes {dimension_semantics = [#tpu.dimension_semantics<parallel>], iteration_bounds = array<i64: 2>, scalar_prefetch = 0 : i64, scratch_operands = 0 : i64, tpu.core_type = #tpu.core_type<tc>, window_params = [{transform_indices = @transform_0, window_bounds = array<i64: 1, 32, 32>}, {transform_indices = @transform_1, window_bounds = array<i64: 1, 32, 32>}, {transform_indices = @transform_2, window_bounds = array<i64: 32, 32>}, {pipeline_mode = #tpu.pipeline_mode<synchronous>, transform_indices = @transform_3, window_bounds = array<i64: 4, 32, 96>}, {pipeline_mode = #tpu.pipeline_mode<synchronous>, transform_indices = @transform_4, window_bounds = array<i64: 3, 96>}, {transform_indices = @transform_5, window_bounds = array<i64: 32, 32>}]} {
    %c0 = arith.constant 0 : index
    %c0_0 = arith.constant 0 : index
    %0 = vector.load %arg3[%c0, %c0_0] : memref<32x32xf32, #tpu.memory_space<vmem>>, vector<32x32xf32>
    %c0_1 = arith.constant 0 : index
    %c0_2 = arith.constant 0 : index
    %c0_3 = arith.constant 0 : index
    %1 = vector.load %arg1[%c0_1, %c0_2, %c0_3] : memref<1x32x32xf32, #tpu.memory_space<vmem>>, vector<1x32x32xf32>
    %2 = vector.shape_cast %1 : vector<1x32x32xf32> to vector<32x32xf32>
    %c0_4 = arith.constant 0 : index
    %c0_5 = arith.constant 0 : index
    %c0_6 = arith.constant 0 : index
    %3 = vector.load %arg2[%c0_4, %c0_5, %c0_6] : memref<1x32x32xf32, #tpu.memory_space<vmem>>, vector<1x32x32xf32>
    %4 = vector.shape_cast %3 : vector<1x32x32xf32> to vector<32x32xf32>
    %c0_7 = arith.constant 0 : index
    %c0_8 = arith.constant 0 : index
    %c0_9 = arith.constant 0 : index
    %5 = vector.load %arg4[%c0_7, %c0_8, %c0_9] : memref<4x32x96xf32, #tpu.memory_space<vmem>>, vector<4x32x96xf32>
    %6 = vector.extract_strided_slice %5 {offsets = [0, 0, 0], sizes = [1, 32, 96], strides = [1, 1, 1]} : vector<4x32x96xf32> to vector<1x32x96xf32>
    %7 = vector.shape_cast %6 : vector<1x32x96xf32> to vector<32x96xf32>
    %8 = vector.extract_strided_slice %7 {offsets = [0, 0], sizes = [32, 64], strides = [1, 1]} : vector<32x96xf32> to vector<32x64xf32>
    %9 = vector.extract_strided_slice %5 {offsets = [1, 0, 0], sizes = [1, 32, 96], strides = [1, 1, 1]} : vector<4x32x96xf32> to vector<1x32x96xf32>
    %10 = vector.shape_cast %9 : vector<1x32x96xf32> to vector<32x96xf32>
    %11 = vector.extract_strided_slice %5 {offsets = [2, 0, 0], sizes = [1, 32, 96], strides = [1, 1, 1]} : vector<4x32x96xf32> to vector<1x32x96xf32>
    %12 = vector.shape_cast %11 : vector<1x32x96xf32> to vector<32x96xf32>
    %13 = vector.extract_strided_slice %5 {offsets = [3, 0, 0], sizes = [1, 32, 96], strides = [1, 1, 1]} : vector<4x32x96xf32> to vector<1x32x96xf32>
    %14 = vector.shape_cast %13 : vector<1x32x96xf32> to vector<32x96xf32>
    %c0_10 = arith.constant 0 : index
    %c0_11 = arith.constant 0 : index
    %15 = vector.load %arg5[%c0_10, %c0_11] : memref<3x96xf32, #tpu.memory_space<vmem>>, vector<3x96xf32>
    %16 = vector.extract_strided_slice %15 {offsets = [0, 0], sizes = [1, 64], strides = [1, 1]} : vector<3x96xf32> to vector<1x64xf32>
    %17 = vector.extract_strided_slice %15 {offsets = [1, 0], sizes = [1, 96], strides = [1, 1]} : vector<3x96xf32> to vector<1x96xf32>
    %18 = vector.extract_strided_slice %15 {offsets = [2, 0], sizes = [1, 96], strides = [1, 1]} : vector<3x96xf32> to vector<1x96xf32>
    %cst = arith.constant dense<0.000000e+00> : vector<32x64xf32>
    %19 = tpu.matmul %0, %8, %cst {dimension_numbers = #tpu.dot_dimension_numbers<[1], [0], [0], [1], [0, 0, 1, 1], [], []>} : vector<32x32xf32>, vector<32x64xf32>, vector<32x64xf32> -> vector<32x64xf32>
    %20 = vector.broadcast %16 : vector<1x64xf32> to vector<32x64xf32>
    %21 = arith.addf %19, %20 : vector<32x64xf32>
    %22 = vector.extract_strided_slice %21 {offsets = [0, 0], sizes = [32, 32], strides = [1, 1]} : vector<32x64xf32> to vector<32x32xf32>
    %cst_12 = arith.constant dense<0.000000e+00> : vector<32x32xf32>
    %23 = tpu.matmul %2, %22, %cst_12 {dimension_numbers = #tpu.dot_dimension_numbers<[1], [0], [0], [1], [0, 0, 1, 1], [], []>} : vector<32x32xf32>, vector<32x32xf32>, vector<32x32xf32> -> vector<32x32xf32>
    %24 = vector.extract_strided_slice %21 {offsets = [0, 32], sizes = [32, 32], strides = [1, 1]} : vector<32x64xf32> to vector<32x32xf32>
    %cst_13 = arith.constant dense<0.000000e+00> : vector<32x32xf32>
    %25 = tpu.matmul %4, %24, %cst_13 {dimension_numbers = #tpu.dot_dimension_numbers<[1], [0], [0], [1], [0, 0, 1, 1], [], []>} : vector<32x32xf32>, vector<32x32xf32>, vector<32x32xf32> -> vector<32x32xf32>
    %cst_14 = arith.constant dense<0.000000e+00> : vector<32x96xf32>
    %26 = tpu.matmul %23, %10, %cst_14 {dimension_numbers = #tpu.dot_dimension_numbers<[1], [0], [0], [1], [0, 0, 1, 1], [], []>} : vector<32x32xf32>, vector<32x96xf32>, vector<32x96xf32> -> vector<32x96xf32>
    %cst_15 = arith.constant dense<0.000000e+00> : vector<32x96xf32>
    %27 = tpu.matmul %25, %12, %cst_15 {dimension_numbers = #tpu.dot_dimension_numbers<[1], [0], [0], [1], [0, 0, 1, 1], [], []>} : vector<32x32xf32>, vector<32x96xf32>, vector<32x96xf32> -> vector<32x96xf32>
    %28 = arith.addf %26, %27 : vector<32x96xf32>
    %29 = vector.broadcast %17 : vector<1x96xf32> to vector<32x96xf32>
    %30 = arith.addf %28, %29 : vector<32x96xf32>
    %cst_16 = arith.constant dense<0.000000e+00> : vector<32x96xf32>
    %31 = tpu.matmul %0, %14, %cst_16 {dimension_numbers = #tpu.dot_dimension_numbers<[1], [0], [0], [1], [0, 0, 1, 1], [], []>} : vector<32x32xf32>, vector<32x96xf32>, vector<32x96xf32> -> vector<32x96xf32>
    %32 = vector.broadcast %18 : vector<1x96xf32> to vector<32x96xf32>
    %33 = arith.addf %31, %32 : vector<32x96xf32>
    %34 = vector.extract_strided_slice %30 {offsets = [0, 0], sizes = [32, 64], strides = [1, 1]} : vector<32x96xf32> to vector<32x64xf32>
    %35 = vector.extract_strided_slice %33 {offsets = [0, 0], sizes = [32, 64], strides = [1, 1]} : vector<32x96xf32> to vector<32x64xf32>
    %36 = arith.addf %34, %35 : vector<32x64xf32>
    %37 = arith.negf %36 : vector<32x64xf32>
    %38 = math.exp %37 : vector<32x64xf32>
    %cst_17 = arith.constant 1.000000e+00 : f32
    %39 = vector.broadcast %cst_17 : f32 to vector<32x64xf32>
    %40 = arith.addf %39, %38 : vector<32x64xf32>
    %41 = arith.divf %39, %40 : vector<32x64xf32>
    %42 = vector.extract_strided_slice %41 {offsets = [0, 0], sizes = [32, 32], strides = [1, 1]} : vector<32x64xf32> to vector<32x32xf32>
    %43 = vector.extract_strided_slice %41 {offsets = [0, 32], sizes = [32, 32], strides = [1, 1]} : vector<32x64xf32> to vector<32x32xf32>
    %44 = vector.extract_strided_slice %30 {offsets = [0, 64], sizes = [32, 32], strides = [1, 1]} : vector<32x96xf32> to vector<32x32xf32>
    %45 = vector.extract_strided_slice %33 {offsets = [0, 64], sizes = [32, 32], strides = [1, 1]} : vector<32x96xf32> to vector<32x32xf32>
    %46 = arith.mulf %42, %45 : vector<32x32xf32>
    %47 = arith.addf %44, %46 : vector<32x32xf32>
    %48 = math.tanh %47 : vector<32x32xf32>
    %49 = arith.subf %0, %48 : vector<32x32xf32>
    %50 = arith.mulf %43, %49 : vector<32x32xf32>
    %51 = arith.addf %48, %50 : vector<32x32xf32>
    %cst_18 = arith.constant dense<0.000000e+00> : vector<32x64xf32>
    %52 = tpu.matmul %51, %8, %cst_18 {dimension_numbers = #tpu.dot_dimension_numbers<[1], [0], [0], [1], [0, 0, 1, 1], [], []>} : vector<32x32xf32>, vector<32x64xf32>, vector<32x64xf32> -> vector<32x64xf32>
    %53 = vector.broadcast %16 : vector<1x64xf32> to vector<32x64xf32>
    %54 = arith.addf %52, %53 : vector<32x64xf32>
    %55 = vector.extract_strided_slice %54 {offsets = [0, 0], sizes = [32, 32], strides = [1, 1]} : vector<32x64xf32> to vector<32x32xf32>
    %cst_19 = arith.constant dense<0.000000e+00> : vector<32x32xf32>
    %56 = tpu.matmul %2, %55, %cst_19 {dimension_numbers = #tpu.dot_dimension_numbers<[1], [0], [0], [1], [0, 0, 1, 1], [], []>} : vector<32x32xf32>, vector<32x32xf32>, vector<32x32xf32> -> vector<32x32xf32>
    %57 = vector.extract_strided_slice %54 {offsets = [0, 32], sizes = [32, 32], strides = [1, 1]} : vector<32x64xf32> to vector<32x32xf32>
    %cst_20 = arith.constant dense<0.000000e+00> : vector<32x32xf32>
    %58 = tpu.matmul %4, %57, %cst_20 {dimension_numbers = #tpu.dot_dimension_numbers<[1], [0], [0], [1], [0, 0, 1, 1], [], []>} : vector<32x32xf32>, vector<32x32xf32>, vector<32x32xf32> -> vector<32x32xf32>
    %cst_21 = arith.constant dense<0.000000e+00> : vector<32x96xf32>
    %59 = tpu.matmul %56, %10, %cst_21 {dimension_numbers = #tpu.dot_dimension_numbers<[1], [0], [0], [1], [0, 0, 1, 1], [], []>} : vector<32x32xf32>, vector<32x96xf32>, vector<32x96xf32> -> vector<32x96xf32>
    %cst_22 = arith.constant dense<0.000000e+00> : vector<32x96xf32>
    %60 = tpu.matmul %58, %12, %cst_22 {dimension_numbers = #tpu.dot_dimension_numbers<[1], [0], [0], [1], [0, 0, 1, 1], [], []>} : vector<32x32xf32>, vector<32x96xf32>, vector<32x96xf32> -> vector<32x96xf32>
    %61 = arith.addf %59, %60 : vector<32x96xf32>
    %62 = vector.broadcast %17 : vector<1x96xf32> to vector<32x96xf32>
    %63 = arith.addf %61, %62 : vector<32x96xf32>
    %cst_23 = arith.constant dense<0.000000e+00> : vector<32x96xf32>
    %64 = tpu.matmul %51, %14, %cst_23 {dimension_numbers = #tpu.dot_dimension_numbers<[1], [0], [0], [1], [0, 0, 1, 1], [], []>} : vector<32x32xf32>, vector<32x96xf32>, vector<32x96xf32> -> vector<32x96xf32>
    %65 = vector.broadcast %18 : vector<1x96xf32> to vector<32x96xf32>
    %66 = arith.addf %64, %65 : vector<32x96xf32>
    %67 = vector.extract_strided_slice %63 {offsets = [0, 0], sizes = [32, 64], strides = [1, 1]} : vector<32x96xf32> to vector<32x64xf32>
    %68 = vector.extract_strided_slice %66 {offsets = [0, 0], sizes = [32, 64], strides = [1, 1]} : vector<32x96xf32> to vector<32x64xf32>
    %69 = arith.addf %67, %68 : vector<32x64xf32>
    %70 = arith.negf %69 : vector<32x64xf32>
    %71 = math.exp %70 : vector<32x64xf32>
    %cst_24 = arith.constant 1.000000e+00 : f32
    %72 = vector.broadcast %cst_24 : f32 to vector<32x64xf32>
    %73 = arith.addf %72, %71 : vector<32x64xf32>
    %74 = arith.divf %72, %73 : vector<32x64xf32>
    %75 = vector.extract_strided_slice %74 {offsets = [0, 0], sizes = [32, 32], strides = [1, 1]} : vector<32x64xf32> to vector<32x32xf32>
    %76 = vector.extract_strided_slice %74 {offsets = [0, 32], sizes = [32, 32], strides = [1, 1]} : vector<32x64xf32> to vector<32x32xf32>
    %77 = vector.extract_strided_slice %63 {offsets = [0, 64], sizes = [32, 32], strides = [1, 1]} : vector<32x96xf32> to vector<32x32xf32>
    %78 = vector.extract_strided_slice %66 {offsets = [0, 64], sizes = [32, 32], strides = [1, 1]} : vector<32x96xf32> to vector<32x32xf32>
    %79 = arith.mulf %75, %78 : vector<32x32xf32>
    %80 = arith.addf %77, %79 : vector<32x32xf32>
    %81 = math.tanh %80 : vector<32x32xf32>
    %82 = arith.subf %51, %81 : vector<32x32xf32>
    %83 = arith.mulf %76, %82 : vector<32x32xf32>
    %84 = arith.addf %81, %83 : vector<32x32xf32>
    %c0_25 = arith.constant 0 : index
    %c0_26 = arith.constant 0 : index
    %85 = vector.load %arg6[%c0_25, %c0_26] : memref<32x32xf32, #tpu.memory_space<vmem>>, vector<32x32xf32>
    tpu.vector_store %arg6[%c0_25, %c0_26], %84 {strides = array<i32>} : memref<32x32xf32, #tpu.memory_space<vmem>>, vector<32x32xf32>,
    return
  }
  func.func @transform_0(%arg0: i32) -> (i32, i32, i32) {
    %c0_i32 = arith.constant 0 : i32
    %c0_i32_0 = arith.constant 0 : i32
    %c0_i32_1 = arith.constant 0 : i32
    return %arg0, %c0_i32, %c0_i32_0 : i32, i32, i32
  }
  func.func @transform_1(%arg0: i32) -> (i32, i32, i32) {
    %c0_i32 = arith.constant 0 : i32
    %c0_i32_0 = arith.constant 0 : i32
    %c0_i32_1 = arith.constant 0 : i32
    return %arg0, %c0_i32, %c0_i32_0 : i32, i32, i32
  }
  func.func @transform_2(%arg0: i32) -> (i32, i32) {
    %c0_i32 = arith.constant 0 : i32
    %c0_i32_0 = arith.constant 0 : i32
    return %arg0, %c0_i32 : i32, i32
  }
  func.func @transform_3(%arg0: i32) -> (i32, i32, i32) {
    %c0_i32 = arith.constant 0 : i32
    %c0_i32_0 = arith.constant 0 : i32
    %c0_i32_1 = arith.constant 0 : i32
    %c0_i32_2 = arith.constant 0 : i32
    return %c0_i32, %c0_i32_0, %c0_i32_1 : i32, i32, i32
  }
  func.func @transform_4(%arg0: i32) -> (i32, i32) {
    %c0_i32 = arith.constant 0 : i32
    %c0_i32_0 = arith.constant 0 : i32
    %c0_i32_1 = arith.constant 0 : i32
    return %c0_i32, %c0_i32_0 : i32, i32
  }
  func.func @transform_5(%arg0: i32) -> (i32, i32) {
    %c0_i32 = arith.constant 0 : i32
    %c0_i32_0 = arith.constant 0 : i32
    return %arg0, %c0_i32 : i32, i32
  }
}

</mosaic_0001>

<llo_original>
// kernel: tpu_custom_call.1
$region0: #{tpu_custom_call.1}
  #allocation0 [shape = 'u32[]', space=smem, size = 0x4, offset = 0x4, fixed_abs, tag = 'smem constant byte address 0x4 - core index']
  #allocation1 [shape = 'u32[72,128]{1,0:T(1,128)}', space=vmem, size = 0x9000, scoped, tag = 'internal scratch']
  %s0 = inlined_call_operand.vmem [shape: f32[2,32,32], index: 0, kind: input, shape index: {}]
  %s1 = inlined_call_operand.hbm [shape: f32[2,32,32], index: 1, kind: input, shape index: {}]
  %s2 = inlined_call_operand.vmem [shape: f32[64,32], index: 2, kind: input, shape index: {}]
  %s3 = inlined_call_operand.hbm [shape: f32[4,32,96], index: 3, kind: input, shape index: {}]
  %s4 = inlined_call_operand.vmem [shape: f32[3,96], index: 4, kind: input, shape index: {}]
  %s5 = inlined_call_operand.vmem [shape: f32[64,32], index: 5, kind: output, shape index: {}]
  %s6 = sld [smem:[#allocation0]]
  $region61: #{tpu_custom_call.1} parent=0
    _
  %s8 = ssub.s32 1, %s6
  %s9 = scalar_select 0, %s8, %s6
  $region1: #{tpu_custom_call.1} parent=0
    #allocation2 [shape = 'u8[32768]{0}', space=vmem, size = 0x8000, scoped, tag = 'input window, operand 1']
    #allocation3 [shape = 's32[2]{0}', space=sflag, size = 0x8, scoped, tag = 'scoped memory for tpu_custom_call.1']
    #allocation4 [shape = 'u8[65536]{0}', space=vmem, size = 0x10000, scoped, tag = 'input window, operand 3, single buffered']
    #allocation5 [shape = 's32[1]{0}', space=sflag, size = 0x4, scoped, tag = 'scoped memory for tpu_custom_call.1']
    %10 = vsyncpa [#allocation3], 0
    %s11 = scalar_lea.sflag [#allocation3], 1
    %12 = vsyncpa %s11, 0
    %13 = vsyncpa [#allocation5], 0
    loop: start=0, step=1, limit=4
    $region2: #{tpu_custom_call.1} parent=1 // loop_pre_header
      _
    $region3: #{tpu_custom_call.1} parent=1 // loop_header
      %s15 = sphi 0, %s19
      %p16 = scmp.ge.s32.totalorder %s15, 4
      %s25 = sphi 0, %s27
      %s28 = sphi 0, %s25
      %s29 = sphi 0, %s28
      %s45 = sphi 0, %s29
      %s51 = sphi 0, %s53
      %s54 = sphi 0, %s51
      %s55 = sphi 0, %s54
      %s71 = sphi 0, %s55
      %s77 = sphi 0, %s79
      %s80 = sphi 0, %s77
      %s81 = sphi 0, %s80
      %s97 = sphi 0, %s81
      %s101 = sphi 0, %s101
      %s103 = sphi 0, %s101
      %s104 = sphi 0, %s103
      %s118 = sphi 0, %s104
      %s122 = sphi 0, %s122
      %s124 = sphi 0, %s122
      %s125 = sphi 0, %s124
      %s139 = sphi 0, %s125
      %s145 = sphi 0, %s147
      %s148 = sphi 0, %s145
      %s149 = sphi 0, %s148
      %s165 = sphi 0, %s149
    $region4: #{tpu_custom_call.1} parent=1 // loop_header_branch
      %18 = sbr.rel (%p16) target = $region8
    $region5: #{tpu_custom_call.1} parent=1 // loop_body
      %s20 = ssub.s32 %s15, 1
      %s21 = ssub.s32 %s15, 2
      %s22 = sadd.s32 %s15, 1
      %s23 = ssub.s32 %s15, %s22
      %p24 = scmp.eq.s32.totalorder %s23, 0
      %s26 = sadd.s32 %s25, 1
      %s27 = scalar_select %p24, %s25, %s26
      %p30 = pneg %p24
      %p31 = scmp.eq.s32.totalorder %s15, 1
      %p32 = por %p30, %p31
      %p33 = scmp.ne.s32.totalorder %s25, %s28
      %p34 = scmp.eq.s32.totalorder %s15, 0
      %p35 = por %p33, %p34
      %p36 = scmp.ne.s32.totalorder %s25, %s28
      %p37 = scmp.eq.s32.totalorder %s20, 1
      %p38 = por %p36, %p37
      %p39 = scmp.ne.s32.totalorder %s28, %s29
      %p40 = scmp.eq.s32.totalorder %s20, 0
      %p41 = por %p39, %p40
      %p42 = scmp.ne.s32.totalorder %s28, %s29
      %p43 = scmp.eq.s32.totalorder %s21, 1
      %p44 = por %p42, %p43
      %p46 = scmp.ne.s32.totalorder %s29, %s45
      %p47 = scmp.eq.s32.totalorder %s21, 0
      %p48 = por %p46, %p47
      %s49 = ssub.s32 %s15, %s22
      %p50 = scmp.eq.s32.totalorder %s49, 0
      %s52 = sadd.s32 %s51, 1
      %s53 = scalar_select %p50, %s51, %s52
      %p56 = pneg %p50
      %p57 = scmp.eq.s32.totalorder %s15, 1
      %p58 = por %p56, %p57
      %p59 = scmp.ne.s32.totalorder %s51, %s54
      %p60 = scmp.eq.s32.totalorder %s15, 0
      %p61 = por %p59, %p60
      %p62 = scmp.ne.s32.totalorder %s51, %s54
      %p63 = scmp.eq.s32.totalorder %s20, 1
      %p64 = por %p62, %p63
      %p65 = scmp.ne.s32.totalorder %s54, %s55
      %p66 = scmp.eq.s32.totalorder %s20, 0
      %p67 = por %p65, %p66
      %p68 = scmp.ne.s32.totalorder %s54, %s55
      %p69 = scmp.eq.s32.totalorder %s21, 1
      %p70 = por %p68, %p69
      %p72 = scmp.ne.s32.totalorder %s55, %s71
      %p73 = scmp.eq.s32.totalorder %s21, 0
      %p74 = por %p72, %p73
      %s75 = ssub.s32 %s15, %s22
      %p76 = scmp.eq.s32.totalorder %s75, 0
      %s78 = sadd.s32 %s77, 1
      %s79 = scalar_select %p76, %s77, %s78
      %p82 = pneg %p76
      %p83 = scmp.eq.s32.totalorder %s15, 1
      %p84 = por %p82, %p83
      %p85 = scmp.ne.s32.totalorder %s77, %s80
      %p86 = scmp.eq.s32.totalorder %s15, 0
      %p87 = por %p85, %p86
      %p88 = scmp.ne.s32.totalorder %s77, %s80
      %p89 = scmp.eq.s32.totalorder %s20, 1
      %p90 = por %p88, %p89
      %p91 = scmp.ne.s32.totalorder %s80, %s81
      %p92 = scmp.eq.s32.totalorder %s20, 0
      %p93 = por %p91, %p92
      %p94 = scmp.ne.s32.totalorder %s80, %s81
      %p95 = scmp.eq.s32.totalorder %s21, 1
      %p96 = por %p94, %p95
      %p98 = scmp.ne.s32.totalorder %s81, %s97
      %p99 = scmp.eq.s32.totalorder %s21, 0
      %p100 = por %p98, %p99
      %s102 = sadd.s32 %s101, 1
      %p105 = scmp.eq.s32.totalorder %s15, 1
      %p106 = scmp.ne.s32.totalorder %s101, %s103
      %p107 = scmp.eq.s32.totalorder %s15, 0
      %p108 = por %p106, %p107
      %p109 = scmp.ne.s32.totalorder %s101, %s103
      %p110 = scmp.eq.s32.totalorder %s20, 1
      %p111 = por %p109, %p110
      %p112 = scmp.ne.s32.totalorder %s103, %s104
      %p113 = scmp.eq.s32.totalorder %s20, 0
      %p114 = por %p112, %p113
      %p115 = scmp.ne.s32.totalorder %s103, %s104
      %p116 = scmp.eq.s32.totalorder %s21, 1
      %p117 = por %p115, %p116
      %p119 = scmp.ne.s32.totalorder %s104, %s118
      %p120 = scmp.eq.s32.totalorder %s21, 0
      %p121 = por %p119, %p120
      %s123 = sadd.s32 %s122, 1
      %p126 = scmp.eq.s32.totalorder %s15, 1
      %p127 = scmp.ne.s32.totalorder %s122, %s124
      %p128 = scmp.eq.s32.totalorder %s15, 0
      %p129 = por %p127, %p128
      %p130 = scmp.ne.s32.totalorder %s122, %s124
      %p131 = scmp.eq.s32.totalorder %s20, 1
      %p132 = por %p130, %p131
      %p133 = scmp.ne.s32.totalorder %s124, %s125
      %p134 = scmp.eq.s32.totalorder %s20, 0
      %p135 = por %p133, %p134
      %p136 = scmp.ne.s32.totalorder %s124, %s125
      %p137 = scmp.eq.s32.totalorder %s21, 1
      %p138 = por %p136, %p137
      %p140 = scmp.ne.s32.totalorder %s125, %s139
      %p141 = scmp.eq.s32.totalorder %s21, 0
      %p142 = por %p140, %p141
      %s143 = ssub.s32 %s15, %s22
      %p144 = scmp.eq.s32.totalorder %s143, 0
      %s146 = sadd.s32 %s145, 1
      %s147 = scalar_select %p144, %s145, %s146
      %p150 = pneg %p144
      %p151 = scmp.eq.s32.totalorder %s15, 1
      %p152 = por %p150, %p151
      %p153 = scmp.ne.s32.totalorder %s145, %s148
      %p154 = scmp.eq.s32.totalorder %s15, 0
      %p155 = por %p153, %p154
      %p156 = scmp.ne.s32.totalorder %s145, %s148
      %p157 = scmp.eq.s32.totalorder %s20, 1
      %p158 = por %p156, %p157
      %p159 = scmp.ne.s32.totalorder %s148, %s149
      %p160 = scmp.eq.s32.totalorder %s20, 0
      %p161 = por %p159, %p160
      %p162 = scmp.ne.s32.totalorder %s148, %s149
      %p163 = scmp.eq.s32.totalorder %s21, 1
      %p164 = por %p162, %p163
      %p166 = scmp.ne.s32.totalorder %s149, %s165
      %p167 = scmp.eq.s32.totalorder %s21, 0
      %p168 = por %p166, %p167
      %p169 = scmp.le.s32.totalorder 1, %s15
      %p170 = scmp.lt.s32.totalorder %s15, 3
      %p171 = pnand %p169, %p170
      %p172 = pneg %p171
      // Predicated region
      $region9: #{tpu_custom_call.1} parent=5 // pred_check
        _
      $region10: #{tpu_custom_call.1} parent=5 // pred_check_branch
        %174 = sbr.rel (%p171) target = $region12
      $region11: #{tpu_custom_call.1} parent=5 // pred_region
        %s175 = ssub.s32 %s15, 1
        // Predicated region
        $region13: #{tpu_custom_call.1} parent=11 // pred_check
          %p176 = pneg %p114
        $region14: #{tpu_custom_call.1} parent=11 // pred_check_branch
          %178 = sbr.rel (%p176) target = $region16
        $region15: #{tpu_custom_call.1} parent=11 // pred_region
          %180 = vsyncadd [#allocation5], 0
          %s181 = sshll.u32 %s3, 4
          %s182 = int_to_ptr.hbm [resolvable:$true] %s181
          %s183 = sshll.u32 [#allocation4], 4
          %s184 = int_to_ptr.vmem [resolvable:$true] %s183
          %189 = dma.hbm_to_vmem [thread:$0]  %s182, 2048, %s184, [#allocation5], 128, 128, 8
        $region16: #{tpu_custom_call.1} parent=11 // pred_fallthru
          _
        // Predicated region
        $region17: #{tpu_custom_call.1} parent=11 // pred_check
          %p190 = pneg %p135
        $region18: #{tpu_custom_call.1} parent=11 // pred_check_branch
          %192 = sbr.rel (%p190) target = $region20
        $region19: #{tpu_custom_call.1} parent=11 // pred_region
          _
        $region20: #{tpu_custom_call.1} parent=11 // pred_fallthru
          _
      $region12: #{tpu_custom_call.1} parent=5 // pred_fallthru
        _
      %p193 = scmp.lt.s32.totalorder %s15, 2
      // Predicated region
      $region21: #{tpu_custom_call.1} parent=5 // pred_check
        %p194 = pneg %p193
      $region22: #{tpu_custom_call.1} parent=5 // pred_check_branch
        %196 = sbr.rel (%p194) target = $region24
      $region23: #{tpu_custom_call.1} parent=5 // pred_region
        // Predicated region
        $region25: #{tpu_custom_call.1} parent=23 // pred_check
          %p197 = pneg %p35
        $region26: #{tpu_custom_call.1} parent=23 // pred_check_branch
          %199 = sbr.rel (%p197) target = $region28
        $region27: #{tpu_custom_call.1} parent=23 // pred_region
          %p200 = scmp.lt.s32.totalorder %s15, 1
          %s201 = scalar_select %p200, %s15, 1
          %s202 = smul.addr %s201, 4
          %s203 = smul.addr %s202, 8
          %s204 = scalar_lea.vmem %s0, %s203
        $region28: #{tpu_custom_call.1} parent=23 // pred_fallthru
          _
        // Predicated region
        $region29: #{tpu_custom_call.1} parent=23 // pred_check
          %p205 = pneg %p61
        $region30: #{tpu_custom_call.1} parent=23 // pred_check_branch
          %207 = sbr.rel (%p205) target = $region32
        $region31: #{tpu_custom_call.1} parent=23 // pred_region
          %s208 = sand.u32 %s51, 1
          %s209 = scalar_lea.sflag [#allocation3], %s208
          %s210 = sand.u32 %s51, 1
          %s211 = smul.addr %s210, 32
          %s212 = scalar_lea.vmem [#allocation2], %s211
          %214 = vsyncadd %s209, 0
          %s215 = smul.addr %s15, 4
          %s216 = smul.addr %s215, 8
          %s217 = scalar_lea.hbm %s1, %s216
          %s218 = sshll.u32 %s217, 4
          %s219 = int_to_ptr.hbm [resolvable:$true] %s218
          %s220 = sshll.u32 %s212, 4
          %s221 = int_to_ptr.vmem [resolvable:$true] %s220
          %226 = dma.hbm_to_vmem [thread:$0]  %s219, 512, %s221, %s209, 128, 128, 8
        $region32: #{tpu_custom_call.1} parent=23 // pred_fallthru
          _
        // Predicated region
        $region33: #{tpu_custom_call.1} parent=23 // pred_check
          %p227 = pneg %p87
        $region34: #{tpu_custom_call.1} parent=23 // pred_check_branch
          %229 = sbr.rel (%p227) target = $region36
        $region35: #{tpu_custom_call.1} parent=23 // pred_region
          %s230 = smul.u32 4, %s15
          %p231 = scmp.lt.s32.totalorder %s230, 7
          %s232 = scalar_select %p231, %s230, 7
          %s233 = smul.addr %s232, 8
          %s234 = scalar_lea.vmem %s2, %s233
          %s235 = smul.u32 4, %s15
        $region36: #{tpu_custom_call.1} parent=23 // pred_fallthru
          _
      $region24: #{tpu_custom_call.1} parent=5 // pred_fallthru
        _
      %p236 = scmp.le.s32.totalorder 1, %s15
      %p237 = scmp.lt.s32.totalorder %s15, 3
      %p238 = pnand %p236, %p237
      %p239 = pneg %p238
      // Predicated region
      $region37: #{tpu_custom_call.1} parent=5 // pred_check
        _
      $region38: #{tpu_custom_call.1} parent=5 // pred_check_branch
        %241 = sbr.rel (%p238) target = $region40
      $region39: #{tpu_custom_call.1} parent=5 // pred_region
        %s242 = ssub.s32 %s15, 1
        %s243 = sand.u32 %s54, 1
        %s244 = scalar_lea.sflag [#allocation3], %s243
        %s245 = sand.u32 %s54, 1
        %s246 = smul.addr %s245, 32
        %s247 = scalar_lea.vmem [#allocation2], %s246
        // Predicated region
        $region41: #{tpu_custom_call.1} parent=39 // pred_check
          %p248 = pneg %p67
        $region42: #{tpu_custom_call.1} parent=39 // pred_check_branch
          %250 = sbr.rel (%p248) target = $region44
        $region43: #{tpu_custom_call.1} parent=39 // pred_region
          %252 = dma.done %s244, 512
        $region44: #{tpu_custom_call.1} parent=39 // pred_fallthru
          _
        // Predicated region
        $region45: #{tpu_custom_call.1} parent=39 // pred_check
          %p253 = pneg %p114
        $region46: #{tpu_custom_call.1} parent=39 // pred_check_branch
          %255 = sbr.rel (%p253) target = $region48
        $region47: #{tpu_custom_call.1} parent=39 // pred_region
          %257 = dma.done [#allocation5], 2048
        $region48: #{tpu_custom_call.1} parent=39 // pred_fallthru
          _
        %p258 = scmp.lt.s32.totalorder %s20, 1
        %s259 = scalar_select %p258, %s20, 1
        %s260 = smul.addr %s259, 4
        %s261 = smul.addr %s260, 8
        %s262 = scalar_lea.vmem %s0, %s261
        %p263 = pneg %p41
        %p264 = pneg %p38
        %s265 = sand.u32 %s54, 1
        %s266 = scalar_lea.sflag [#allocation3], %s265
        %s267 = sand.u32 %s54, 1
        %s268 = smul.addr %s267, 32
        %s269 = scalar_lea.vmem [#allocation2], %s268
        %p270 = pneg %p67
        %p271 = pneg %p64
        %s272 = smul.u32 4, %s20
        %p273 = scmp.lt.s32.totalorder %s272, 7
        %s274 = scalar_select %p273, %s272, 7
        %s275 = smul.addr %s274, 8
        %s276 = scalar_lea.vmem %s2, %s275
        %p277 = pneg %p93
        %p278 = pneg %p90
        %p279 = pneg %p114
        %p280 = pneg %p111
        %p281 = pneg %p135
        %p282 = pneg %p132
        %p283 = pneg %p161
        %p284 = pneg %p158
        %s285 = smul.u32 4, %s20
        %p286 = scmp.lt.s32.totalorder %s285, 7
        %s287 = scalar_select %p286, %s285, 7
        %s288 = smul.addr %s287, 8
        %s289 = scalar_lea.vmem %s5, %s288
        %p290 = scmp.lt.s32.totalorder %s20, 1
        %s291 = scalar_select %p290, %s20, 1
        %s292 = smul.addr %s291, 4
        %s293 = smul.addr %s292, 8
        %s294 = scalar_lea.vmem %s0, %s293
        %s295 = smul.u32 4, %s20
        %p296 = scmp.lt.s32.totalorder %s295, 7
        %s297 = scalar_select %p296, %s295, 7
        %s298 = smul.addr %s297, 8
        %s299 = scalar_lea.vmem %s2, %s298
        %s300 = smul.u32 4, %s20
        %s301 = smul.u32 4, %s20
        %p302 = scmp.lt.s32.totalorder %s301, 7
        %s303 = scalar_select %p302, %s301, 7
        %s304 = smul.addr %s303, 8
        %s305 = scalar_lea.vmem %s5, %s304
        %s306 = smul.u32 4, %s20
        %v307 = vld [vmem:[%s299] sm:$0xff]
        %v308 = vld [vmem:[%s299 + $0x8] sm:$0xff]
        %v309 = vld [vmem:[%s299 + $0x10] sm:$0xff]
        %v310 = vld [vmem:[%s299 + $0x18] sm:$0xff]
        %v311 = vld [vmem:[%s294] sm:$0xff]
        %v312 = vld [vmem:[%s294 + $0x8] sm:$0xff]
        %v313 = vld [vmem:[%s294 + $0x10] sm:$0xff]
        %v314 = vld [vmem:[%s294 + $0x18] sm:$0xff]
        %v315 = vld [vmem:[%s247] sm:$0xff]
        %v316 = vld [vmem:[%s247 + $0x8] sm:$0xff]
        %v317 = vld [vmem:[%s247 + $0x10] sm:$0xff]
        %v318 = vld [vmem:[%s247 + $0x18] sm:$0xff]
        %v319 = vld [vmem:[#allocation4] sm:$0xff]
        %v320 = vld [vmem:[#allocation4 + $0x8] sm:$0xff]
        %v321 = vld [vmem:[#allocation4 + $0x10] sm:$0xff]
        %v322 = vld [vmem:[#allocation4 + $0x18] sm:$0xff]
        %v323 = vld [vmem:[#allocation4 + $0x20] sm:$0xff]
        %v324 = vld [vmem:[#allocation4 + $0x28] sm:$0xff]
        %v325 = vld [vmem:[#allocation4 + $0x30] sm:$0xff]
        %v326 = vld [vmem:[#allocation4 + $0x38] sm:$0xff]
        %v327 = vld [vmem:[#allocation4 + $0x40] sm:$0xff]
        %v328 = vld [vmem:[#allocation4 + $0x48] sm:$0xff]
        %v329 = vld [vmem:[#allocation4 + $0x50] sm:$0xff]
        %v330 = vld [vmem:[#allocation4 + $0x58] sm:$0xff]
        %v331 = vld [vmem:[#allocation4 + $0x60] sm:$0xff]
        %v332 = vld [vmem:[#allocation4 + $0x68] sm:$0xff]
        %v333 = vld [vmem:[#allocation4 + $0x70] sm:$0xff]
        %v334 = vld [vmem:[#allocation4 + $0x78] sm:$0xff]
        %v335 = vld [vmem:[%s4] sm:$0x7]
        %v336 = vperm.slane %v335, 0
        %vm337 = vcmask 261120
        %v339 = vsel %vm337, %v307, 0
        %v342 = vsel %vm337, %v308, 0
        %v345 = vsel %vm337, %v309, 0
        %v348 = vsel %vm337, %v310, 0
        %350 = vmatpush.msra.mxu0 0.0
        %351 = vmatpush.msra.mxu0 0.0
        %352 = vmatpush.msra.mxu0 0.0
        %353 = vmatpush.msra.mxu0 0.0
        %354 = vmatpush.msra.mxu0 0.0
        %355 = vmatpush.msra.mxu0 0.0
        %356 = vmatpush.msra.mxu0 0.0
        %357 = vmatpush.msra.mxu0 0.0
        %358 = vmatpush.msra.mxu0 0.0
        %359 = vmatpush.msra.mxu0 0.0
        %360 = vmatpush.msra.mxu0 0.0
        %361 = vmatpush.msra.mxu0 0.0
        %362 = vmatpush.msra.mxu0 %v322
        %363 = vmatpush.msra.mxu0 %v321
        %364 = vmatpush.msra.mxu0 %v320
        %365 = vmatpush.msra.mxu0 %v319
        %366 = vmatmul.f32.gmra.mxu0 %v339
        %v367 = vpop.f32.mrf.mxu0
        %v368 = vadd.f32 %v336, %v367
        %369 = vmatmul.f32.gmra.mxu0 %v342
        %v370 = vpop.f32.mrf.mxu0
        %v371 = vadd.f32 %v336, %v370
        %372 = vmatmul.f32.gmra.mxu0 %v345
        %v373 = vpop.f32.mrf.mxu0
        %v374 = vadd.f32 %v336, %v373
        %375 = vmatmul.f32.gmra.mxu0 %v348
        %v376 = vpop.f32.mrf.mxu0
        %v377 = vadd.f32 %v336, %v376
        %378 = vdwg.mxu0
        %v380 = vsel %vm337, %v311, 0
        %v383 = vsel %vm337, %v312, 0
        %v386 = vsel %vm337, %v313, 0
        %v389 = vsel %vm337, %v314, 0
        %391 = vmatpush.msra.mxu0 0.0
        %392 = vmatpush.msra.mxu0 0.0
        %393 = vmatpush.msra.mxu0 0.0
        %394 = vmatpush.msra.mxu0 0.0
        %395 = vmatpush.msra.mxu0 0.0
        %396 = vmatpush.msra.mxu0 0.0
        %397 = vmatpush.msra.mxu0 0.0
        %398 = vmatpush.msra.mxu0 0.0
        %399 = vmatpush.msra.mxu0 0.0
        %400 = vmatpush.msra.mxu0 0.0
        %401 = vmatpush.msra.mxu0 0.0
        %402 = vmatpush.msra.mxu0 0.0
        %403 = vmatpush.msra.mxu0 %v377
        %404 = vmatpush.msra.mxu0 %v374
        %405 = vmatpush.msra.mxu0 %v371
        %406 = vmatpush.msra.mxu0 %v368
        %407 = vmatmul.f32.gmra.mxu0 %v380
        %v408 = vpop.f32.mrf.mxu0
        %v409 = vadd.f32 0.0, %v408
        %410 = vmatmul.f32.gmra.mxu0 %v383
        %v411 = vpop.f32.mrf.mxu0
        %v412 = vadd.f32 0.0, %v411
        %413 = vmatmul.f32.gmra.mxu0 %v386
        %v414 = vpop.f32.mrf.mxu0
        %v415 = vadd.f32 0.0, %v414
        %416 = vmatmul.f32.gmra.mxu0 %v389
        %v417 = vpop.f32.mrf.mxu0
        %v418 = vadd.f32 0.0, %v417
        %419 = vdwg.mxu0
        %424 = vrot.lane.b32.xlu0 %v368, 96
        %v425 = vpop.permute.xlu0 %424
        %426 = vrot.lane.b32.xlu0 %v371, 96
        %v427 = vpop.permute.xlu0 %426
        %428 = vrot.lane.b32.xlu0 %v374, 96
        %v429 = vpop.permute.xlu0 %428
        %430 = vrot.lane.b32.xlu0 %v377, 96
        %v431 = vpop.permute.xlu0 %430
        %v437 = vsel %vm337, %v315, 0
        %v440 = vsel %vm337, %v316, 0
        %v443 = vsel %vm337, %v317, 0
        %v446 = vsel %vm337, %v318, 0
        %448 = vmatpush.msra.mxu0 0.0
        %449 = vmatpush.msra.mxu0 0.0
        %450 = vmatpush.msra.mxu0 0.0
        %451 = vmatpush.msra.mxu0 0.0
        %452 = vmatpush.msra.mxu0 0.0
        %453 = vmatpush.msra.mxu0 0.0
        %454 = vmatpush.msra.mxu0 0.0
        %455 = vmatpush.msra.mxu0 0.0
        %456 = vmatpush.msra.mxu0 0.0
        %457 = vmatpush.msra.mxu0 0.0
        %458 = vmatpush.msra.mxu0 0.0
        %459 = vmatpush.msra.mxu0 0.0
        %460 = vmatpush.msra.mxu0 %v431
        %461 = vmatpush.msra.mxu0 %v429
        %462 = vmatpush.msra.mxu0 %v427
        %463 = vmatpush.msra.mxu0 %v425
        %464 = vmatmul.f32.gmra.mxu0 %v437
        %v465 = vpop.f32.mrf.mxu0
        %v466 = vadd.f32 0.0, %v465
        %467 = vmatmul.f32.gmra.mxu0 %v440
        %v468 = vpop.f32.mrf.mxu0
        %v469 = vadd.f32 0.0, %v468
        %470 = vmatmul.f32.gmra.mxu0 %v443
        %v471 = vpop.f32.mrf.mxu0
        %v472 = vadd.f32 0.0, %v471
        %473 = vmatmul.f32.gmra.mxu0 %v446
        %v474 = vpop.f32.mrf.mxu0
        %v475 = vadd.f32 0.0, %v474
        %476 = vdwg.mxu0
        %v478 = vsel %vm337, %v466, 0
        %v481 = vsel %vm337, %v469, 0
        %v484 = vsel %vm337, %v472, 0
        %v487 = vsel %vm337, %v475, 0
        %489 = vmatpush.msra.mxu0 0.0
        %490 = vmatpush.msra.mxu0 0.0
        %491 = vmatpush.msra.mxu0 0.0
        %492 = vmatpush.msra.mxu0 0.0
        %493 = vmatpush.msra.mxu0 0.0
        %494 = vmatpush.msra.mxu0 0.0
        %495 = vmatpush.msra.mxu0 0.0
        %496 = vmatpush.msra.mxu0 0.0
        %497 = vmatpush.msra.mxu0 0.0
        %498 = vmatpush.msra.mxu0 0.0
        %499 = vmatpush.msra.mxu0 0.0
        %500 = vmatpush.msra.mxu0 0.0
        %501 = vmatpush.msra.mxu0 %v330
        %502 = vmatpush.msra.mxu0 %v329
        %503 = vmatpush.msra.mxu0 %v328
        %504 = vmatpush.msra.mxu0 %v327
        %505 = vmatmul.f32.gmra.mxu0 %v478
        %v506 = vpop.f32.mrf.mxu0
        %v507 = vadd.f32 0.0, %v506
        %508 = vmatmul.f32.gmra.mxu0 %v481
        %v509 = vpop.f32.mrf.mxu0
        %v510 = vadd.f32 0.0, %v509
        %511 = vmatmul.f32.gmra.mxu0 %v484
        %v512 = vpop.f32.mrf.mxu0
        %v513 = vadd.f32 0.0, %v512
        %514 = vmatmul.f32.gmra.mxu0 %v487
        %v515 = vpop.f32.mrf.mxu0
        %v516 = vadd.f32 0.0, %v515
        %517 = vdwg.mxu0
        %v519 = vsel %vm337, %v409, 0
        %v522 = vsel %vm337, %v412, 0
        %v525 = vsel %vm337, %v415, 0
        %v528 = vsel %vm337, %v418, 0
        %530 = vmatpush.msra.mxu0 0.0
        %531 = vmatpush.msra.mxu0 0.0
        %532 = vmatpush.msra.mxu0 0.0
        %533 = vmatpush.msra.mxu0 0.0
        %534 = vmatpush.msra.mxu0 0.0
        %535 = vmatpush.msra.mxu0 0.0
        %536 = vmatpush.msra.mxu0 0.0
        %537 = vmatpush.msra.mxu0 0.0
        %538 = vmatpush.msra.mxu0 0.0
        %539 = vmatpush.msra.mxu0 0.0
        %540 = vmatpush.msra.mxu0 0.0
        %541 = vmatpush.msra.mxu0 0.0
        %542 = vmatpush.msra.mxu0 %v326
        %543 = vmatpush.msra.mxu0 %v325
        %544 = vmatpush.msra.mxu0 %v324
        %545 = vmatpush.msra.mxu0 %v323
        %546 = vmatmul.f32.gmra.mxu0 %v519
        %v547 = vpop.f32.mrf.mxu0
        %v548 = vadd.f32 %v507, %v547
        %549 = vmatmul.f32.gmra.mxu0 %v522
        %v550 = vpop.f32.mrf.mxu0
        %v551 = vadd.f32 %v510, %v550
        %552 = vmatmul.f32.gmra.mxu0 %v525
        %v553 = vpop.f32.mrf.mxu0
        %v554 = vadd.f32 %v513, %v553
        %555 = vmatmul.f32.gmra.mxu0 %v528
        %v556 = vpop.f32.mrf.mxu0
        %v557 = vadd.f32 %v516, %v556
        %558 = vdwg.mxu0
        %v559 = vperm.slane %v335, 1
        %v560 = vadd.f32 %v548, %v559
        %v561 = vadd.f32 %v551, %v559
        %v562 = vadd.f32 %v554, %v559
        %v563 = vadd.f32 %v557, %v559
        %v564 = vperm.slane %v335, 2
        %565 = vmatpush.msra.mxu0 0.0
        %566 = vmatpush.msra.mxu0 0.0
        %567 = vmatpush.msra.mxu0 0.0
        %568 = vmatpush.msra.mxu0 0.0
        %569 = vmatpush.msra.mxu0 0.0
        %570 = vmatpush.msra.mxu0 0.0
        %571 = vmatpush.msra.mxu0 0.0
        %572 = vmatpush.msra.mxu0 0.0
        %573 = vmatpush.msra.mxu0 0.0
        %574 = vmatpush.msra.mxu0 0.0
        %575 = vmatpush.msra.mxu0 0.0
        %576 = vmatpush.msra.mxu0 0.0
        %577 = vmatpush.msra.mxu0 %v334
        %578 = vmatpush.msra.mxu0 %v333
        %579 = vmatpush.msra.mxu0 %v332
        %580 = vmatpush.msra.mxu0 %v331
        %581 = vmatmul.f32.gmra.mxu0 %v339
        %v582 = vpop.f32.mrf.mxu0
        %v583 = vadd.f32 %v564, %v582
        %584 = vmatmul.f32.gmra.mxu0 %v342
        %v585 = vpop.f32.mrf.mxu0
        %v586 = vadd.f32 %v564, %v585
        %587 = vmatmul.f32.gmra.mxu0 %v345
        %v588 = vpop.f32.mrf.mxu0
        %v589 = vadd.f32 %v564, %v588
        %590 = vmatmul.f32.gmra.mxu0 %v348
        %v591 = vpop.f32.mrf.mxu0
        %v592 = vadd.f32 %v564, %v591
        %593 = vdwg.mxu0
        %v594 = vadd.f32 %v560, %v583
        %v595 = vadd.f32 %v561, %v586
        %v596 = vadd.f32 %v562, %v589
        %v597 = vadd.f32 %v563, %v592
        %v598 = vxor.u32 %v594, 2147483648
        %v599 = vxor.u32 %v595, 2147483648
        %v600 = vxor.u32 %v596, 2147483648
        %v601 = vxor.u32 %v597, 2147483648
        %v602 = vmul.f32 %v598, 1.442695
        %v603 = vpow.pop %v602
        %v604 = vmul.f32 %v599, 1.442695
        %v605 = vpow.pop %v604
        %v606 = vmul.f32 %v600, 1.442695
        %v607 = vpow.pop %v606
        %v608 = vmul.f32 %v601, 1.442695
        %v609 = vpow.pop %v608
        %v610 = vadd.f32 %v603, 1.0
        %v611 = vadd.f32 %v605, 1.0
        %v612 = vadd.f32 %v607, 1.0
        %v613 = vadd.f32 %v609, 1.0
        %v614 = vrcp.pop %v610
        %v615 = vmul.f32 %v610, %v614
        %v616 = vsub.f32 1.0, %v615
        %v617 = vmul.f32 %v614, %v616
        %v618 = vadd.f32 %v614, %v617
        %vm619 = vweird.f32 %v610
        %vm620 = vweird.f32 %v614
        %vm621 = vmor %vm619, %vm620
        %v622 = vsel %vm621, %v614, %v618
        %v623 = vand.u32 2147483647, %v610
        %vm624 = vcmp.eq.f32.partialorder %v623, 8.507059e+37
        %v625 = vand.u32 %v610, 2147483648
        %v626 = vor.u32 1.1754944e-38, %v625
        %v627 = vsel %vm624, %v626, %v622
        %v628 = vmul.f32 1.0, %v627
        %v629 = vrcp.pop %v611
        %v630 = vmul.f32 %v611, %v629
        %v631 = vsub.f32 1.0, %v630
        %v632 = vmul.f32 %v629, %v631
        %v633 = vadd.f32 %v629, %v632
        %vm634 = vweird.f32 %v611
        %vm635 = vweird.f32 %v629
        %vm636 = vmor %vm634, %vm635
        %v637 = vsel %vm636, %v629, %v633
        %v638 = vand.u32 2147483647, %v611
        %vm639 = vcmp.eq.f32.partialorder %v638, 8.507059e+37
        %v640 = vand.u32 %v611, 2147483648
        %v641 = vor.u32 1.1754944e-38, %v640
        %v642 = vsel %vm639, %v641, %v637
        %v643 = vmul.f32 1.0, %v642
        %v644 = vrcp.pop %v612
        %v645 = vmul.f32 %v612, %v644
        %v646 = vsub.f32 1.0, %v645
        %v647 = vmul.f32 %v644, %v646
        %v648 = vadd.f32 %v644, %v647
        %vm649 = vweird.f32 %v612
        %vm650 = vweird.f32 %v644
        %vm651 = vmor %vm649, %vm650
        %v652 = vsel %vm651, %v644, %v648
        %v653 = vand.u32 2147483647, %v612
        %vm654 = vcmp.eq.f32.partialorder %v653, 8.507059e+37
        %v655 = vand.u32 %v612, 2147483648
        %v656 = vor.u32 1.1754944e-38, %v655
        %v657 = vsel %vm654, %v656, %v652
        %v658 = vmul.f32 1.0, %v657
        %v659 = vrcp.pop %v613
        %v660 = vmul.f32 %v613, %v659
        %v661 = vsub.f32 1.0, %v660
        %v662 = vmul.f32 %v659, %v661
        %v663 = vadd.f32 %v659, %v662
        %vm664 = vweird.f32 %v613
        %vm665 = vweird.f32 %v659
        %vm666 = vmor %vm664, %vm665
        %v667 = vsel %vm666, %v659, %v663
        %v668 = vand.u32 2147483647, %v613
        %vm669 = vcmp.eq.f32.partialorder %v668, 8.507059e+37
        %v670 = vand.u32 %v613, 2147483648
        %v671 = vor.u32 1.1754944e-38, %v670
        %v672 = vsel %vm669, %v671, %v667
        %v673 = vmul.f32 1.0, %v672
        %678 = vrot.lane.b32.xlu0 %v583, 64
        %v679 = vpop.permute.xlu0 %678
        %680 = vrot.lane.b32.xlu0 %v586, 64
        %v681 = vpop.permute.xlu0 %680
        %682 = vrot.lane.b32.xlu0 %v589, 64
        %v683 = vpop.permute.xlu0 %682
        %684 = vrot.lane.b32.xlu0 %v592, 64
        %v685 = vpop.permute.xlu0 %684
        %v690 = vmul.f32 %v628, %v679
        %v691 = vmul.f32 %v643, %v681
        %v692 = vmul.f32 %v658, %v683
        %v693 = vmul.f32 %v673, %v685
        %698 = vrot.lane.b32.xlu0 %v690, 64
        %v699 = vpop.permute.xlu0 %698
        %700 = vrot.lane.b32.xlu0 %v691, 64
        %v701 = vpop.permute.xlu0 %700
        %702 = vrot.lane.b32.xlu0 %v692, 64
        %v703 = vpop.permute.xlu0 %702
        %704 = vrot.lane.b32.xlu0 %v693, 64
        %v705 = vpop.permute.xlu0 %704
        %v710 = vadd.f32 %v560, %v699
        %v711 = vadd.f32 %v561, %v701
        %v712 = vadd.f32 %v562, %v703
        %v713 = vadd.f32 %v563, %v705
        %v714 = vtanh.pop %v710
        %v715 = vtanh.pop %v711
        %v716 = vtanh.pop %v712
        %v717 = vtanh.pop %v713
        %722 = vrot.lane.b32.xlu0 %v714, 64
        %v723 = vpop.permute.xlu0 %722
        %724 = vrot.lane.b32.xlu0 %v715, 64
        %v725 = vpop.permute.xlu0 %724
        %726 = vrot.lane.b32.xlu0 %v716, 64
        %v727 = vpop.permute.xlu0 %726
        %728 = vrot.lane.b32.xlu0 %v717, 64
        %v729 = vpop.permute.xlu0 %728
        %v734 = vsub.f32 %v307, %v723
        %v735 = vsub.f32 %v308, %v725
        %v736 = vsub.f32 %v309, %v727
        %v737 = vsub.f32 %v310, %v729
        %742 = vrot.lane.b32.xlu0 %v734, 32
        %v743 = vpop.permute.xlu0 %742
        %744 = vrot.lane.b32.xlu0 %v735, 32
        %v745 = vpop.permute.xlu0 %744
        %746 = vrot.lane.b32.xlu0 %v736, 32
        %v747 = vpop.permute.xlu0 %746
        %748 = vrot.lane.b32.xlu0 %v737, 32
        %v749 = vpop.permute.xlu0 %748
        %v754 = vmul.f32 %v628, %v743
        %v755 = vmul.f32 %v643, %v745
        %v756 = vmul.f32 %v658, %v747
        %v757 = vmul.f32 %v673, %v749
        %762 = vrot.lane.b32.xlu0 %v754, 32
        %v763 = vpop.permute.xlu0 %762
        %764 = vrot.lane.b32.xlu0 %v755, 32
        %v765 = vpop.permute.xlu0 %764
        %766 = vrot.lane.b32.xlu0 %v756, 32
        %v767 = vpop.permute.xlu0 %766
        %768 = vrot.lane.b32.xlu0 %v757, 32
        %v769 = vpop.permute.xlu0 %768
        %v774 = vadd.f32 %v714, %v763
        %v775 = vadd.f32 %v715, %v765
        %v776 = vadd.f32 %v716, %v767
        %v777 = vadd.f32 %v717, %v769
        %782 = vrot.lane.b32.xlu0 %v774, 64
        %v783 = vpop.permute.xlu0 %782
        %784 = vrot.lane.b32.xlu0 %v775, 64
        %v785 = vpop.permute.xlu0 %784
        %786 = vrot.lane.b32.xlu0 %v776, 64
        %v787 = vpop.permute.xlu0 %786
        %788 = vrot.lane.b32.xlu0 %v777, 64
        %v789 = vpop.permute.xlu0 %788
        %v790 = vsel %vm337, %v783, 0
        %v792 = vsel %vm337, %v785, 0
        %v794 = vsel %vm337, %v787, 0
        %v796 = vsel %vm337, %v789, 0
        %798 = vmatpush.msra.mxu0 0.0
        %799 = vmatpush.msra.mxu0 0.0
        %800 = vmatpush.msra.mxu0 0.0
        %801 = vmatpush.msra.mxu0 0.0
        %802 = vmatpush.msra.mxu0 0.0
        %803 = vmatpush.msra.mxu0 0.0
        %804 = vmatpush.msra.mxu0 0.0
        %805 = vmatpush.msra.mxu0 0.0
        %806 = vmatpush.msra.mxu0 0.0
        %807 = vmatpush.msra.mxu0 0.0
        %808 = vmatpush.msra.mxu0 0.0
        %809 = vmatpush.msra.mxu0 0.0
        %810 = vmatpush.msra.mxu0 %v322
        %811 = vmatpush.msra.mxu0 %v321
        %812 = vmatpush.msra.mxu0 %v320
        %813 = vmatpush.msra.mxu0 %v319
        %814 = vmatmul.f32.gmra.mxu0 %v790
        %v815 = vpop.f32.mrf.mxu0
        %v816 = vadd.f32 %v336, %v815
        %817 = vmatmul.f32.gmra.mxu0 %v792
        %v818 = vpop.f32.mrf.mxu0
        %v819 = vadd.f32 %v336, %v818
        %820 = vmatmul.f32.gmra.mxu0 %v794
        %v821 = vpop.f32.mrf.mxu0
        %v822 = vadd.f32 %v336, %v821
        %823 = vmatmul.f32.gmra.mxu0 %v796
        %v824 = vpop.f32.mrf.mxu0
        %v825 = vadd.f32 %v336, %v824
        %826 = vdwg.mxu0
        %827 = vmatpush.msra.mxu0 0.0
        %828 = vmatpush.msra.mxu0 0.0
        %829 = vmatpush.msra.mxu0 0.0
        %830 = vmatpush.msra.mxu0 0.0
        %831 = vmatpush.msra.mxu0 0.0
        %832 = vmatpush.msra.mxu0 0.0
        %833 = vmatpush.msra.mxu0 0.0
        %834 = vmatpush.msra.mxu0 0.0
        %835 = vmatpush.msra.mxu0 0.0
        %836 = vmatpush.msra.mxu0 0.0
        %837 = vmatpush.msra.mxu0 0.0
        %838 = vmatpush.msra.mxu0 0.0
        %839 = vmatpush.msra.mxu0 %v825
        %840 = vmatpush.msra.mxu0 %v822
        %841 = vmatpush.msra.mxu0 %v819
        %842 = vmatpush.msra.mxu0 %v816
        %843 = vmatmul.f32.gmra.mxu0 %v380
        %v844 = vpop.f32.mrf.mxu0
        %v845 = vadd.f32 0.0, %v844
        %846 = vmatmul.f32.gmra.mxu0 %v383
        %v847 = vpop.f32.mrf.mxu0
        %v848 = vadd.f32 0.0, %v847
        %849 = vmatmul.f32.gmra.mxu0 %v386
        %v850 = vpop.f32.mrf.mxu0
        %v851 = vadd.f32 0.0, %v850
        %852 = vmatmul.f32.gmra.mxu0 %v389
        %v853 = vpop.f32.mrf.mxu0
        %v854 = vadd.f32 0.0, %v853
        %855 = vdwg.mxu0
        %860 = vrot.lane.b32.xlu0 %v816, 96
        %v861 = vpop.permute.xlu0 %860
        %862 = vrot.lane.b32.xlu0 %v819, 96
        %v863 = vpop.permute.xlu0 %862
        %864 = vrot.lane.b32.xlu0 %v822, 96
        %v865 = vpop.permute.xlu0 %864
        %866 = vrot.lane.b32.xlu0 %v825, 96
        %v867 = vpop.permute.xlu0 %866
        %872 = vmatpush.msra.mxu0 0.0
        %873 = vmatpush.msra.mxu0 0.0
        %874 = vmatpush.msra.mxu0 0.0
        %875 = vmatpush.msra.mxu0 0.0
        %876 = vmatpush.msra.mxu0 0.0
        %877 = vmatpush.msra.mxu0 0.0
        %878 = vmatpush.msra.mxu0 0.0
        %879 = vmatpush.msra.mxu0 0.0
        %880 = vmatpush.msra.mxu0 0.0
        %881 = vmatpush.msra.mxu0 0.0
        %882 = vmatpush.msra.mxu0 0.0
        %883 = vmatpush.msra.mxu0 0.0
        %884 = vmatpush.msra.mxu0 %v867
        %885 = vmatpush.msra.mxu0 %v865
        %886 = vmatpush.msra.mxu0 %v863
        %887 = vmatpush.msra.mxu0 %v861
        %888 = vmatmul.f32.gmra.mxu0 %v437
        %v889 = vpop.f32.mrf.mxu0
        %v890 = vadd.f32 0.0, %v889
        %891 = vmatmul.f32.gmra.mxu0 %v440
        %v892 = vpop.f32.mrf.mxu0
        %v893 = vadd.f32 0.0, %v892
        %894 = vmatmul.f32.gmra.mxu0 %v443
        %v895 = vpop.f32.mrf.mxu0
        %v896 = vadd.f32 0.0, %v895
        %897 = vmatmul.f32.gmra.mxu0 %v446
        %v898 = vpop.f32.mrf.mxu0
        %v899 = vadd.f32 0.0, %v898
        %900 = vdwg.mxu0
        %v902 = vsel %vm337, %v890, 0
        %v905 = vsel %vm337, %v893, 0
        %v908 = vsel %vm337, %v896, 0
        %v911 = vsel %vm337, %v899, 0
        %913 = vmatpush.msra.mxu0 0.0
        %914 = vmatpush.msra.mxu0 0.0
        %915 = vmatpush.msra.mxu0 0.0
        %916 = vmatpush.msra.mxu0 0.0
        %917 = vmatpush.msra.mxu0 0.0
        %918 = vmatpush.msra.mxu0 0.0
        %919 = vmatpush.msra.mxu0 0.0
        %920 = vmatpush.msra.mxu0 0.0
        %921 = vmatpush.msra.mxu0 0.0
        %922 = vmatpush.msra.mxu0 0.0
        %923 = vmatpush.msra.mxu0 0.0
        %924 = vmatpush.msra.mxu0 0.0
        %925 = vmatpush.msra.mxu0 %v330
        %926 = vmatpush.msra.mxu0 %v329
        %927 = vmatpush.msra.mxu0 %v328
        %928 = vmatpush.msra.mxu0 %v327
        %929 = vmatmul.f32.gmra.mxu0 %v902
        %v930 = vpop.f32.mrf.mxu0
        %v931 = vadd.f32 0.0, %v930
        %932 = vmatmul.f32.gmra.mxu0 %v905
        %v933 = vpop.f32.mrf.mxu0
        %v934 = vadd.f32 0.0, %v933
        %935 = vmatmul.f32.gmra.mxu0 %v908
        %v936 = vpop.f32.mrf.mxu0
        %v937 = vadd.f32 0.0, %v936
        %938 = vmatmul.f32.gmra.mxu0 %v911
        %v939 = vpop.f32.mrf.mxu0
        %v940 = vadd.f32 0.0, %v939
        %941 = vdwg.mxu0
        %v943 = vsel %vm337, %v845, 0
        %v946 = vsel %vm337, %v848, 0
        %v949 = vsel %vm337, %v851, 0
        %v952 = vsel %vm337, %v854, 0
        %954 = vmatpush.msra.mxu0 0.0
        %955 = vmatpush.msra.mxu0 0.0
        %956 = vmatpush.msra.mxu0 0.0
        %957 = vmatpush.msra.mxu0 0.0
        %958 = vmatpush.msra.mxu0 0.0
        %959 = vmatpush.msra.mxu0 0.0
        %960 = vmatpush.msra.mxu0 0.0
        %961 = vmatpush.msra.mxu0 0.0
        %962 = vmatpush.msra.mxu0 0.0
        %963 = vmatpush.msra.mxu0 0.0
        %964 = vmatpush.msra.mxu0 0.0
        %965 = vmatpush.msra.mxu0 0.0
        %966 = vmatpush.msra.mxu0 %v326
        %967 = vmatpush.msra.mxu0 %v325
        %968 = vmatpush.msra.mxu0 %v324
        %969 = vmatpush.msra.mxu0 %v323
        %970 = vmatmul.f32.gmra.mxu0 %v943
        %v971 = vpop.f32.mrf.mxu0
        %v972 = vadd.f32 %v931, %v971
        %973 = vmatmul.f32.gmra.mxu0 %v946
        %v974 = vpop.f32.mrf.mxu0
        %v975 = vadd.f32 %v934, %v974
        %976 = vmatmul.f32.gmra.mxu0 %v949
        %v977 = vpop.f32.mrf.mxu0
        %v978 = vadd.f32 %v937, %v977
        %979 = vmatmul.f32.gmra.mxu0 %v952
        %v980 = vpop.f32.mrf.mxu0
        %v981 = vadd.f32 %v940, %v980
        %982 = vdwg.mxu0
        %v983 = vadd.f32 %v972, %v559
        %v984 = vadd.f32 %v975, %v559
        %v985 = vadd.f32 %v978, %v559
        %v986 = vadd.f32 %v981, %v559
        %987 = vmatpush.msra.mxu0 0.0
        %988 = vmatpush.msra.mxu0 0.0
        %989 = vmatpush.msra.mxu0 0.0
        %990 = vmatpush.msra.mxu0 0.0
        %991 = vmatpush.msra.mxu0 0.0
        %992 = vmatpush.msra.mxu0 0.0
        %993 = vmatpush.msra.mxu0 0.0
        %994 = vmatpush.msra.mxu0 0.0
        %995 = vmatpush.msra.mxu0 0.0
        %996 = vmatpush.msra.mxu0 0.0
        %997 = vmatpush.msra.mxu0 0.0
        %998 = vmatpush.msra.mxu0 0.0
        %999 = vmatpush.msra.mxu0 %v334
        %1000 = vmatpush.msra.mxu0 %v333
        %1001 = vmatpush.msra.mxu0 %v332
        %1002 = vmatpush.msra.mxu0 %v331
        %1003 = vmatmul.f32.gmra.mxu0 %v790
        %v1004 = vpop.f32.mrf.mxu0
        %v1005 = vadd.f32 %v564, %v1004
        %1006 = vmatmul.f32.gmra.mxu0 %v792
        %v1007 = vpop.f32.mrf.mxu0
        %v1008 = vadd.f32 %v564, %v1007
        %1009 = vmatmul.f32.gmra.mxu0 %v794
        %v1010 = vpop.f32.mrf.mxu0
        %v1011 = vadd.f32 %v564, %v1010
        %1012 = vmatmul.f32.gmra.mxu0 %v796
        %v1013 = vpop.f32.mrf.mxu0
        %v1014 = vadd.f32 %v564, %v1013
        %1015 = vdwg.mxu0
        %v1016 = vadd.f32 %v983, %v1005
        %v1017 = vadd.f32 %v984, %v1008
        %v1018 = vadd.f32 %v985, %v1011
        %v1019 = vadd.f32 %v986, %v1014
        %v1020 = vxor.u32 %v1016, 2147483648
        %v1021 = vxor.u32 %v1017, 2147483648
        %v1022 = vxor.u32 %v1018, 2147483648
        %v1023 = vxor.u32 %v1019, 2147483648
        %v1024 = vmul.f32 %v1020, 1.442695
        %v1025 = vpow.pop %v1024
        %v1026 = vmul.f32 %v1021, 1.442695
        %v1027 = vpow.pop %v1026
        %v1028 = vmul.f32 %v1022, 1.442695
        %v1029 = vpow.pop %v1028
        %v1030 = vmul.f32 %v1023, 1.442695
        %v1031 = vpow.pop %v1030
        %v1032 = vadd.f32 %v1025, 1.0
        %v1033 = vadd.f32 %v1027, 1.0
        %v1034 = vadd.f32 %v1029, 1.0
        %v1035 = vadd.f32 %v1031, 1.0
        %v1036 = vrcp.pop %v1032
        %v1037 = vmul.f32 %v1032, %v1036
        %v1038 = vsub.f32 1.0, %v1037
        %v1039 = vmul.f32 %v1036, %v1038
        %v1040 = vadd.f32 %v1036, %v1039
        %vm1041 = vweird.f32 %v1032
        %vm1042 = vweird.f32 %v1036
        %vm1043 = vmor %vm1041, %vm1042
        %v1044 = vsel %vm1043, %v1036, %v1040
        %v1045 = vand.u32 2147483647, %v1032
        %vm1046 = vcmp.eq.f32.partialorder %v1045, 8.507059e+37
        %v1047 = vand.u32 %v1032, 2147483648
        %v1048 = vor.u32 1.1754944e-38, %v1047
        %v1049 = vsel %vm1046, %v1048, %v1044
        %v1050 = vmul.f32 1.0, %v1049
        %v1051 = vrcp.pop %v1033
        %v1052 = vmul.f32 %v1033, %v1051
        %v1053 = vsub.f32 1.0, %v1052
        %v1054 = vmul.f32 %v1051, %v1053
        %v1055 = vadd.f32 %v1051, %v1054
        %vm1056 = vweird.f32 %v1033
        %vm1057 = vweird.f32 %v1051
        %vm1058 = vmor %vm1056, %vm1057
        %v1059 = vsel %vm1058, %v1051, %v1055
        %v1060 = vand.u32 2147483647, %v1033
        %vm1061 = vcmp.eq.f32.partialorder %v1060, 8.507059e+37
        %v1062 = vand.u32 %v1033, 2147483648
        %v1063 = vor.u32 1.1754944e-38, %v1062
        %v1064 = vsel %vm1061, %v1063, %v1059
        %v1065 = vmul.f32 1.0, %v1064
        %v1066 = vrcp.pop %v1034
        %v1067 = vmul.f32 %v1034, %v1066
        %v1068 = vsub.f32 1.0, %v1067
        %v1069 = vmul.f32 %v1066, %v1068
        %v1070 = vadd.f32 %v1066, %v1069
        %vm1071 = vweird.f32 %v1034
        %vm1072 = vweird.f32 %v1066
        %vm1073 = vmor %vm1071, %vm1072
        %v1074 = vsel %vm1073, %v1066, %v1070
        %v1075 = vand.u32 2147483647, %v1034
        %vm1076 = vcmp.eq.f32.partialorder %v1075, 8.507059e+37
        %v1077 = vand.u32 %v1034, 2147483648
        %v1078 = vor.u32 1.1754944e-38, %v1077
        %v1079 = vsel %vm1076, %v1078, %v1074
        %v1080 = vmul.f32 1.0, %v1079
        %v1081 = vrcp.pop %v1035
        %v1082 = vmul.f32 %v1035, %v1081
        %v1083 = vsub.f32 1.0, %v1082
        %v1084 = vmul.f32 %v1081, %v1083
        %v1085 = vadd.f32 %v1081, %v1084
        %vm1086 = vweird.f32 %v1035
        %vm1087 = vweird.f32 %v1081
        %vm1088 = vmor %vm1086, %vm1087
        %v1089 = vsel %vm1088, %v1081, %v1085
        %v1090 = vand.u32 2147483647, %v1035
        %vm1091 = vcmp.eq.f32.partialorder %v1090, 8.507059e+37
        %v1092 = vand.u32 %v1035, 2147483648
        %v1093 = vor.u32 1.1754944e-38, %v1092
        %v1094 = vsel %vm1091, %v1093, %v1089
        %v1095 = vmul.f32 1.0, %v1094
        %1100 = vrot.lane.b32.xlu0 %v1005, 64
        %v1101 = vpop.permute.xlu0 %1100
        %1102 = vrot.lane.b32.xlu0 %v1008, 64
        %v1103 = vpop.permute.xlu0 %1102
        %1104 = vrot.lane.b32.xlu0 %v1011, 64
        %v1105 = vpop.permute.xlu0 %1104
        %1106 = vrot.lane.b32.xlu0 %v1014, 64
        %v1107 = vpop.permute.xlu0 %1106
        %v1112 = vmul.f32 %v1050, %v1101
        %v1113 = vmul.f32 %v1065, %v1103
        %v1114 = vmul.f32 %v1080, %v1105
        %v1115 = vmul.f32 %v1095, %v1107
        %1120 = vrot.lane.b32.xlu0 %v1112, 64
        %v1121 = vpop.permute.xlu0 %1120
        %1122 = vrot.lane.b32.xlu0 %v1113, 64
        %v1123 = vpop.permute.xlu0 %1122
        %1124 = vrot.lane.b32.xlu0 %v1114, 64
        %v1125 = vpop.permute.xlu0 %1124
        %1126 = vrot.lane.b32.xlu0 %v1115, 64
        %v1127 = vpop.permute.xlu0 %1126
        %v1132 = vadd.f32 %v983, %v1121
        %v1133 = vadd.f32 %v984, %v1123
        %v1134 = vadd.f32 %v985, %v1125
        %v1135 = vadd.f32 %v986, %v1127
        %v1136 = vtanh.pop %v1132
        %v1137 = vtanh.pop %v1133
        %v1138 = vtanh.pop %v1134
        %v1139 = vtanh.pop %v1135
        %v1140 = vsub.f32 %v774, %v1136
        %v1141 = vsub.f32 %v775, %v1137
        %v1142 = vsub.f32 %v776, %v1138
        %v1143 = vsub.f32 %v777, %v1139
        %1148 = vrot.lane.b32.xlu0 %v1140, 96
        %v1149 = vpop.permute.xlu0 %1148
        %1150 = vrot.lane.b32.xlu0 %v1141, 96
        %v1151 = vpop.permute.xlu0 %1150
        %1152 = vrot.lane.b32.xlu0 %v1142, 96
        %v1153 = vpop.permute.xlu0 %1152
        %1154 = vrot.lane.b32.xlu0 %v1143, 96
        %v1155 = vpop.permute.xlu0 %1154
        %v1160 = vmul.f32 %v1050, %v1149
        %v1161 = vmul.f32 %v1065, %v1151
        %v1162 = vmul.f32 %v1080, %v1153
        %v1163 = vmul.f32 %v1095, %v1155
        %1168 = vrot.lane.b32.xlu0 %v1160, 32
        %v1169 = vpop.permute.xlu0 %1168
        %1170 = vrot.lane.b32.xlu0 %v1161, 32
        %v1171 = vpop.permute.xlu0 %1170
        %1172 = vrot.lane.b32.xlu0 %v1162, 32
        %v1173 = vpop.permute.xlu0 %1172
        %1174 = vrot.lane.b32.xlu0 %v1163, 32
        %v1175 = vpop.permute.xlu0 %1174
        %v1180 = vadd.f32 %v1136, %v1169
        %v1181 = vadd.f32 %v1137, %v1171
        %v1182 = vadd.f32 %v1138, %v1173
        %v1183 = vadd.f32 %v1139, %v1175
        %1188 = vrot.lane.b32.xlu0 %v1180, 64
        %v1189 = vpop.permute.xlu0 %1188
        %1190 = vrot.lane.b32.xlu0 %v1181, 64
        %v1191 = vpop.permute.xlu0 %1190
        %1192 = vrot.lane.b32.xlu0 %v1182, 64
        %v1193 = vpop.permute.xlu0 %1192
        %1194 = vrot.lane.b32.xlu0 %v1183, 64
        %v1195 = vpop.permute.xlu0 %1194
        %1200 = vst.msk [vmem:[%s305] sm:$0xff] %vm337, %v1189
        %1201 = vst.msk [vmem:[%s305 + $0x8] sm:$0xff] %vm337, %v1191
        %1202 = vst.msk [vmem:[%s305 + $0x10] sm:$0xff] %vm337, %v1193
        %1203 = vst.msk [vmem:[%s305 + $0x18] sm:$0xff] %vm337, %v1195
        %s1204 = smul.u32 4, %s20
        %p1205 = scmp.lt.s32.totalorder %s1204, 7
        %s1206 = scalar_select %p1205, %s1204, 7
        %s1207 = smul.addr %s1206, 8
        %s1208 = scalar_lea.vmem %s5, %s1207
        // Predicated region
        $region49: #{tpu_custom_call.1} parent=39 // pred_check
          %p1209 = pneg %p158
        $region50: #{tpu_custom_call.1} parent=39 // pred_check_branch
          %1211 = sbr.rel (%p1209) target = $region52
        $region51: #{tpu_custom_call.1} parent=39 // pred_region
          %s1212 = smul.u32 4, %s20
        $region52: #{tpu_custom_call.1} parent=39 // pred_fallthru
          _
      $region40: #{tpu_custom_call.1} parent=5 // pred_fallthru
        _
      %p1213 = scmp.le.s32.totalorder 2, %s15
      // Predicated region
      $region53: #{tpu_custom_call.1} parent=5 // pred_check
        %p1214 = pneg %p1213
      $region54: #{tpu_custom_call.1} parent=5 // pred_check_branch
        %1216 = sbr.rel (%p1214) target = $region56
      $region55: #{tpu_custom_call.1} parent=5 // pred_region
        %s1217 = ssub.s32 %s15, 2
        // Predicated region
        $region57: #{tpu_custom_call.1} parent=55 // pred_check
          %p1218 = pneg %p164
        $region58: #{tpu_custom_call.1} parent=55 // pred_check_branch
          %1220 = sbr.rel (%p1218) target = $region60
        $region59: #{tpu_custom_call.1} parent=55 // pred_region
          %s1221 = smul.u32 4, %s21
          %p1222 = scmp.lt.s32.totalorder %s1221, 7
          %s1223 = scalar_select %p1222, %s1221, 7
          %s1224 = smul.addr %s1223, 8
          %s1225 = scalar_lea.vmem %s5, %s1224
        $region60: #{tpu_custom_call.1} parent=55 // pred_fallthru
          _
      $region56: #{tpu_custom_call.1} parent=5 // pred_fallthru
        _
    $region6: #{tpu_custom_call.1} parent=1 // loop_footer
      %s19 = sadd.s32 1, %s15
    $region7: #{tpu_custom_call.1} parent=1 // loop_footer_branch
      %14 = sbr.rel target = $region3
    $region8: #{tpu_custom_call.1} parent=1 // loop_exit
      _
    %1226 = vsyncpa [#allocation3], 1
    %s1227 = scalar_lea.sflag [#allocation3], 1
    %1228 = vsyncpa %s1227, 1
    %1229 = vsyncpa [#allocation5], 1

</llo_original>
